<compile_context>
chip_gen: v7x
topology: tpu7x:2x2x1
jax: 0.10.0
libtpu: 0.0.40
codegen_flags: <defaults>
</compile_context>

<pallas_src>
import jax
import jax.numpy as jnp
from jax.experimental import pallas as pl
from jax.experimental.pallas import tpu as pltpu


def _round_up(n, m):
    return ((n + m - 1) // m) * m


def _default_tile_and_vmem():
    """Generation-aware defaults: big batch tiles, VMEM limit under the physical cap."""
    try:
        info = pltpu.get_tpu_info()
        vmem_bytes = int(getattr(info, "vmem_capacity_bytes", 64 << 20))
    except Exception:
        vmem_bytes = 64 << 20                       # conservative (v7x-sized)
    if vmem_bytes >= (96 << 20):                    # v5e / v6e: 128 MiB per core
        return 16384, 96 << 20
    return 8192, 48 << 20                           # v7x: 64 MiB per core


def attack_model_kernel(x_ref, w1_ref, b1_ref, w2_ref, b2_ref,
                        w3_ref, b3_ref, w4_ref, b4_ref, o_ref):
    """One batch tile: [Linear->ReLU]x3 -> Linear -> Sigmoid, fully in VMEM.

    Activations are carried feature-major, shape (features, TILE_B), keeping the
    batch on the 128-lane axis so every intermediate is lane-dense. Weights are
    PyTorch (out, in) bf16; biases f32 (out, 1). MXU matmuls accumulate in f32;
    bias-add / ReLU / sigmoid run in f32.
    """
    x = x_ref[...]                                              # (TILE_B, C) bf16

    # Layer 1: Linear(C, 128) + ReLU     (Dropout(0.3) == identity in eval)
    # w1 (128, C) x x (TILE_B, C), contracting the feature axis -> (128, TILE_B)
    h = jax.lax.dot_general(w1_ref[...], x,
                            dimension_numbers=(((1,), (1,)), ((), ())),
                            preferred_element_type=jnp.float32)
    h = jnp.maximum(h + b1_ref[...], 0.0).astype(jnp.bfloat16)

    # Layer 2: Linear(128, 64) + ReLU    (Dropout(0.2) == identity in eval)
    h = jax.lax.dot_general(w2_ref[...], h,
                            dimension_numbers=(((1,), (0,)), ((), ())),
                            preferred_element_type=jnp.float32)
    h = jnp.maximum(h + b2_ref[...], 0.0).astype(jnp.bfloat16)

    # Layer 3: Linear(64, 64) + ReLU
    h = jax.lax.dot_general(w3_ref[...], h,
                            dimension_numbers=(((1,), (0,)), ((), ())),
                            preferred_element_type=jnp.float32)
    h = jnp.maximum(h + b3_ref[...], 0.0).astype(jnp.bfloat16)

    # Layer 4: Linear(64, 1) + Sigmoid -> lane-dense (1, TILE_B) row.
    logits = jax.lax.dot_general(w4_ref[...], h,
                                 dimension_numbers=(((1,), (0,)), ((), ())),
                                 preferred_element_type=jnp.float32)
    o_ref[...] = jax.nn.sigmoid(logits + b4_ref[...])           # b4 (1,1) broadcasts


def attack_model_forward(x, params, tile_b=None, vmem_limit_bytes=None):
    """x: (B, num_classes), any float/int dtype. Returns (B, 1) float32."""
    w1, b1, w2, b2, w3, b3, w4, b4 = params
    B, C = x.shape

    d_tile, d_vmem = _default_tile_and_vmem()
    tile_b = d_tile if tile_b is None else tile_b
    vmem_limit_bytes = d_vmem if vmem_limit_bytes is None else vmem_limit_bytes

    # x.float() then down to bf16 for the MXU; streaming bf16 halves the
    # dominant HBM->VMEM traffic (the kernel consumed it as bf16 anyway).
    x = x.astype(jnp.bfloat16)

    # Batch tiling: one lane-aligned tile for small B, big tiles otherwise.
    TILE_B = tile_b if B > tile_b else _round_up(max(B, 16), 128)
    num_tiles = pl.cdiv(B, TILE_B)
    B_pad = num_tiles * TILE_B
    if B_pad != B:
        x = jnp.pad(x, ((0, B_pad - B), (0, 0)))

    flops = 2 * B_pad * (C * 128 + 128 * 64 + 64 * 64 + 64)
    bytes_accessed = B_pad * C * 2 + B_pad * 4 + sum(
        int(p.size) * p.dtype.itemsize for p in params)

    def wspec(p):
        # Small weight/bias with a constant block index -> stays VMEM-resident
        # (Pallas skips the DMA when the block index does not change).
        return pl.BlockSpec(p.shape, lambda i: (0, 0))

    out = pl.pallas_call(
        attack_model_kernel,
        grid=(num_tiles,),
        in_specs=[
            pl.BlockSpec((TILE_B, C), lambda i: (i, 0)),        # x batch tile
            wspec(w1), wspec(b1), wspec(w2), wspec(b2),
            wspec(w3), wspec(b3), wspec(w4), wspec(b4),
        ],
        # Single lane-contiguous output row: successive tiles append along lanes.
        out_specs=pl.BlockSpec((1, TILE_B), lambda i: (0, i)),
        out_shape=jax.ShapeDtypeStruct((1, B_pad), jnp.float32),
        compiler_params=pltpu.CompilerParams(
            dimension_semantics=("parallel",),
            vmem_limit_bytes=vmem_limit_bytes),
        cost_estimate=pl.CostEstimate(
            flops=flops, transcendentals=B_pad, bytes_accessed=bytes_accessed),
    )(x, w1, b1, w2, b2, w3, b3, w4, b4)

    # (1, B_pad) lane-major == batch order; drop padding, restore (B, 1).
    return out.reshape(B_pad, 1)[:B]


def init_params(key, num_classes):
    """PyTorch nn.Linear default init, U(-1/sqrt(fan_in), +1/sqrt(fan_in)).

    Weights stored in PyTorch (out_features, in_features) orientation, pre-cast
    to bf16 once (MXU operand dtype); biases stored f32 as (out_features, 1)
    for the feature-major (out, TILE_B) activation layout in the kernel.
    """
    dims = [(num_classes, 128), (128, 64), (64, 64), (64, 1)]
    params = []
    for fan_in, fan_out in dims:
        key, kw, kb = jax.random.split(key, 3)
        bound = 1.0 / (fan_in ** 0.5)
        w = jax.random.uniform(kw, (fan_out, fan_in), jnp.float32, -bound, bound)
        b = jax.random.uniform(kb, (fan_out, 1), jnp.float32, -bound, bound)
        params += [w.astype(jnp.bfloat16), b]
    return params


def reference_forward(x, params):
    """Pure-JAX f32 reference of the same forward (dropout = identity)."""
    w1, b1, w2, b2, w3, b3, w4, b4 = params
    f32 = lambda a: a.astype(jnp.float32)
    h = jnp.maximum(f32(x) @ f32(w1).T + f32(b1).T, 0.0)
    h = jnp.maximum(h @ f32(w2).T + f32(b2).T, 0.0)
    h = jnp.maximum(h @ f32(w3).T + f32(b3).T, 0.0)
    return jax.nn.sigmoid(h @ f32(w4).T + f32(b4).T)


if __name__ == "__main__":
    num_classes = 10
    batch = 8

    key = jax.random.PRNGKey(0)
    key, kx = jax.random.split(key)
    x = jax.random.normal(kx, (batch, num_classes), jnp.float32)

    params = init_params(key, num_classes)

    out = attack_model_forward(x, params)
    out = jax.block_until_ready(out)

    ref = reference_forward(x, params)
    assert out.shape == (batch, 1), out.shape
    # bf16 x / bf16 MXU operands (f32 accumulation) -> loosened tolerance vs f32 ref.
    assert jnp.allclose(out, ref, atol=2e-2, rtol=2e-2), "mismatch vs reference"

    print("KERNEL_OK")
</pallas_src>

<mosaic_0001>
module attributes {stable_mosaic.version = 11 : i64} {
  func.func @attack_model_kernel(%arg0: i32, %arg1: memref<128x10xbf16, #tpu.memory_space<vmem>>, %arg2: memref<128x10xbf16, #tpu.memory_space<vmem>>, %arg3: memref<128x1xf32, #tpu.memory_space<vmem>>, %arg4: memref<64x128xbf16, #tpu.memory_space<vmem>>, %arg5: memref<64x1xf32, #tpu.memory_space<vmem>>, %arg6: memref<64x64xbf16, #tpu.memory_space<vmem>>, %arg7: memref<64x1xf32, #tpu.memory_space<vmem>>, %arg8: memref<1x64xbf16, #tpu.memory_space<vmem>>, %arg9: memref<1x1xf32, #tpu.memory_space<vmem>>, %arg10: memref<1x128xf32, #tpu.memory_space<vmem>>) attributes {dimension_semantics = [#tpu.dimension_semantics<parallel>], iteration_bounds = array<i64: 1>, scalar_prefetch = 0 : i64, scratch_operands = 0 : i64, tpu.core_type = #tpu.core_type<tc>, window_params = [{transform_indices = @transform_0, window_bounds = array<i64: 128, 10>}, {pipeline_mode = #tpu.pipeline_mode<synchronous>, transform_indices = @transform_1, window_bounds = array<i64: 128, 10>}, {pipeline_mode = #tpu.pipeline_mode<synchronous>, transform_indices = @transform_2, window_bounds = array<i64: 128, 1>}, {pipeline_mode = #tpu.pipeline_mode<synchronous>, transform_indices = @transform_3, window_bounds = array<i64: 64, 128>}, {pipeline_mode = #tpu.pipeline_mode<synchronous>, transform_indices = @transform_4, window_bounds = array<i64: 64, 1>}, {pipeline_mode = #tpu.pipeline_mode<synchronous>, transform_indices = @transform_5, window_bounds = array<i64: 64, 64>}, {pipeline_mode = #tpu.pipeline_mode<synchronous>, transform_indices = @transform_6, window_bounds = array<i64: 64, 1>}, {pipeline_mode = #tpu.pipeline_mode<synchronous>, transform_indices = @transform_7, window_bounds = array<i64: 1, 64>}, {pipeline_mode = #tpu.pipeline_mode<synchronous>, transform_indices = @transform_8, window_bounds = array<i64: 1, 1>}, {transform_indices = @transform_9, window_bounds = array<i64: 1, 128>}]} {
    %c0 = arith.constant 0 : index
    %c0_0 = arith.constant 0 : index
    %0 = vector.load %arg1[%c0, %c0_0] : memref<128x10xbf16, #tpu.memory_space<vmem>>, vector<128x10xbf16>
    %c0_1 = arith.constant 0 : index
    %c0_2 = arith.constant 0 : index
    %1 = vector.load %arg2[%c0_1, %c0_2] : memref<128x10xbf16, #tpu.memory_space<vmem>>, vector<128x10xbf16>
    %cst = arith.constant dense<0.000000e+00> : vector<128x128xf32>
    %2 = tpu.matmul %1, %0, %cst {dimension_numbers = #tpu.dot_dimension_numbers<[1], [1], [0], [0], [0, 0, 1, 0], [], []>} : vector<128x10xbf16>, vector<128x10xbf16>, vector<128x128xf32> -> vector<128x128xf32>
    %c0_3 = arith.constant 0 : index
    %c0_4 = arith.constant 0 : index
    %3 = vector.load %arg3[%c0_3, %c0_4] : memref<128x1xf32, #tpu.memory_space<vmem>>, vector<128x1xf32>
    %4 = vector.broadcast %3 : vector<128x1xf32> to vector<128x128xf32>
    %5 = arith.addf %2, %4 : vector<128x128xf32>
    %cst_5 = arith.constant 0.000000e+00 : f32
    %6 = vector.broadcast %cst_5 : f32 to vector<128x128xf32>
    %7 = arith.maximumf %5, %6 : vector<128x128xf32>
    %8 = arith.truncf %7 : vector<128x128xf32> to vector<128x128xbf16>
    %c0_6 = arith.constant 0 : index
    %c0_7 = arith.constant 0 : index
    %9 = vector.load %arg4[%c0_6, %c0_7] : memref<64x128xbf16, #tpu.memory_space<vmem>>, vector<64x128xbf16>
    %cst_8 = arith.constant dense<0.000000e+00> : vector<64x128xf32>
    %10 = tpu.matmul %9, %8, %cst_8 {dimension_numbers = #tpu.dot_dimension_numbers<[1], [0], [0], [1], [0, 0, 1, 1], [], []>} : vector<64x128xbf16>, vector<128x128xbf16>, vector<64x128xf32> -> vector<64x128xf32>
    %c0_9 = arith.constant 0 : index
    %c0_10 = arith.constant 0 : index
    %11 = vector.load %arg5[%c0_9, %c0_10] : memref<64x1xf32, #tpu.memory_space<vmem>>, vector<64x1xf32>
    %12 = vector.broadcast %11 : vector<64x1xf32> to vector<64x128xf32>
    %13 = arith.addf %10, %12 : vector<64x128xf32>
    %cst_11 = arith.constant 0.000000e+00 : f32
    %14 = vector.broadcast %cst_11 : f32 to vector<64x128xf32>
    %15 = arith.maximumf %13, %14 : vector<64x128xf32>
    %16 = arith.truncf %15 : vector<64x128xf32> to vector<64x128xbf16>
    %c0_12 = arith.constant 0 : index
    %c0_13 = arith.constant 0 : index
    %17 = vector.load %arg6[%c0_12, %c0_13] : memref<64x64xbf16, #tpu.memory_space<vmem>>, vector<64x64xbf16>
    %cst_14 = arith.constant dense<0.000000e+00> : vector<64x128xf32>
    %18 = tpu.matmul %17, %16, %cst_14 {dimension_numbers = #tpu.dot_dimension_numbers<[1], [0], [0], [1], [0, 0, 1, 1], [], []>} : vector<64x64xbf16>, vector<64x128xbf16>, vector<64x128xf32> -> vector<64x128xf32>
    %c0_15 = arith.constant 0 : index
    %c0_16 = arith.constant 0 : index
    %19 = vector.load %arg7[%c0_15, %c0_16] : memref<64x1xf32, #tpu.memory_space<vmem>>, vector<64x1xf32>
    %20 = vector.broadcast %19 : vector<64x1xf32> to vector<64x128xf32>
    %21 = arith.addf %18, %20 : vector<64x128xf32>
    %cst_17 = arith.constant 0.000000e+00 : f32
    %22 = vector.broadcast %cst_17 : f32 to vector<64x128xf32>
    %23 = arith.maximumf %21, %22 : vector<64x128xf32>
    %24 = arith.truncf %23 : vector<64x128xf32> to vector<64x128xbf16>
    %c0_18 = arith.constant 0 : index
    %c0_19 = arith.constant 0 : index
    %25 = vector.load %arg8[%c0_18, %c0_19] : memref<1x64xbf16, #tpu.memory_space<vmem>>, vector<1x64xbf16>
    %cst_20 = arith.constant dense<0.000000e+00> : vector<1x128xf32>
    %26 = tpu.matmul %25, %24, %cst_20 {dimension_numbers = #tpu.dot_dimension_numbers<[1], [0], [0], [1], [0, 0, 1, 1], [], []>} : vector<1x64xbf16>, vector<64x128xbf16>, vector<1x128xf32> -> vector<1x128xf32>
    %c0_21 = arith.constant 0 : index
    %c0_22 = arith.constant 0 : index
    %27 = vector.load %arg9[%c0_21, %c0_22] : memref<1x1xf32, #tpu.memory_space<vmem>>, vector<1x1xf32>
    %28 = vector.broadcast %27 : vector<1x1xf32> to vector<1x128xf32>
    %29 = arith.addf %26, %28 : vector<1x128xf32>
    %30 = arith.negf %29 : vector<1x128xf32>
    %31 = math.exp %30 : vector<1x128xf32>
    %cst_23 = arith.constant 1.000000e+00 : f32
    %32 = vector.broadcast %cst_23 : f32 to vector<1x128xf32>
    %33 = arith.addf %32, %31 : vector<1x128xf32>
    %34 = arith.divf %32, %33 : vector<1x128xf32>
    %c0_24 = arith.constant 0 : index
    %c0_25 = arith.constant 0 : index
    %35 = vector.load %arg10[%c0_24, %c0_25] : memref<1x128xf32, #tpu.memory_space<vmem>>, vector<1x128xf32>
    tpu.vector_store %arg10[%c0_24, %c0_25], %34 {strides = array<i32>} : memref<1x128xf32, #tpu.memory_space<vmem>>, vector<1x128xf32>,
    return
  }
  func.func @transform_0(%arg0: i32) -> (i32, i32) {
    %c0_i32 = arith.constant 0 : i32
    %c0_i32_0 = arith.constant 0 : i32
    return %arg0, %c0_i32 : i32, i32
  }
  func.func @transform_1(%arg0: i32) -> (i32, i32) {
    %c0_i32 = arith.constant 0 : i32
    %c0_i32_0 = arith.constant 0 : i32
    %c0_i32_1 = arith.constant 0 : i32
    return %c0_i32, %c0_i32_0 : i32, i32
  }
  func.func @transform_2(%arg0: i32) -> (i32, i32) {
    %c0_i32 = arith.constant 0 : i32
    %c0_i32_0 = arith.constant 0 : i32
    %c0_i32_1 = arith.constant 0 : i32
    return %c0_i32, %c0_i32_0 : i32, i32
  }
  func.func @transform_3(%arg0: i32) -> (i32, i32) {
    %c0_i32 = arith.constant 0 : i32
    %c0_i32_0 = arith.constant 0 : i32
    %c0_i32_1 = arith.constant 0 : i32
    return %c0_i32, %c0_i32_0 : i32, i32
  }
  func.func @transform_4(%arg0: i32) -> (i32, i32) {
    %c0_i32 = arith.constant 0 : i32
    %c0_i32_0 = arith.constant 0 : i32
    %c0_i32_1 = arith.constant 0 : i32
    return %c0_i32, %c0_i32_0 : i32, i32
  }
  func.func @transform_5(%arg0: i32) -> (i32, i32) {
    %c0_i32 = arith.constant 0 : i32
    %c0_i32_0 = arith.constant 0 : i32
    %c0_i32_1 = arith.constant 0 : i32
    return %c0_i32, %c0_i32_0 : i32, i32
  }
  func.func @transform_6(%arg0: i32) -> (i32, i32) {
    %c0_i32 = arith.constant 0 : i32
    %c0_i32_0 = arith.constant 0 : i32
    %c0_i32_1 = arith.constant 0 : i32
    return %c0_i32, %c0_i32_0 : i32, i32
  }
  func.func @transform_7(%arg0: i32) -> (i32, i32) {
    %c0_i32 = arith.constant 0 : i32
    %c0_i32_0 = arith.constant 0 : i32
    %c0_i32_1 = arith.constant 0 : i32
    return %c0_i32, %c0_i32_0 : i32, i32
  }
  func.func @transform_8(%arg0: i32) -> (i32, i32) {
    %c0_i32 = arith.constant 0 : i32
    %c0_i32_0 = arith.constant 0 : i32
    %c0_i32_1 = arith.constant 0 : i32
    return %c0_i32, %c0_i32_0 : i32, i32
  }
  func.func @transform_9(%arg0: i32) -> (i32, i32) {
    %c0_i32 = arith.constant 0 : i32
    %c0_i32_0 = arith.constant 0 : i32
    return %c0_i32, %arg0 : i32, i32
  }
}

</mosaic_0001>

<llo_original>
// kernel: tpu_custom_call.1
$region0: #{tpu_custom_call.1}
  #allocation0 [shape = 'u32[]', space=smem, size = 0x4, offset = 0x4, fixed_abs, tag = 'smem constant byte address 0x4 - core index']
  #allocation1 [shape = 'u32[144,128]{1,0:T(1,128)}', space=vmem, size = 0x12000, scoped, tag = 'internal scratch']
  #allocation2 [shape = 'f32[1,1]{1,0:T(1,128)S(1)}', space=vmem, size = 0x200, scoped, tag = 'scoped memory for tpu_custom_call.1']
  %s0 = inlined_call_operand.vmem [shape: bf16[128,10], index: 0, kind: input, shape index: {}]
  %s1 = inlined_call_operand.vmem [shape: bf16[128,10], index: 1, kind: input, shape index: {}]
  %s2 = inlined_call_operand.vmem [shape: f32[128,1], index: 2, kind: input, shape index: {}]
  %s3 = inlined_call_operand.vmem [shape: bf16[64,128], index: 3, kind: input, shape index: {}]
  %s4 = inlined_call_operand.vmem [shape: f32[64,1], index: 4, kind: input, shape index: {}]
  %s5 = inlined_call_operand.vmem [shape: bf16[64,64], index: 5, kind: input, shape index: {}]
  %s6 = inlined_call_operand.vmem [shape: f32[64,1], index: 6, kind: input, shape index: {}]
  %s7 = inlined_call_operand.vmem [shape: bf16[1,64], index: 7, kind: input, shape index: {}]
  %s8 = inlined_call_operand.<no memory space> [shape: f32[1,1], index: 8, kind: input, shape index: {}]
  %s9 = inlined_call_operand.hbm [shape: f32[1,128], index: 9, kind: output, shape index: {}]
  %s10 = sld [smem:[#allocation0]]
  $region46: #{tpu_custom_call.1} parent=0
    _
  %s12 = ssub.s32 1, %s10
  %s13 = scalar_select 0, %s12, %s10
  %v14 = vstv %s8
  %15 = vst [vmem:[#allocation2] sm:$0x1] %v14
  $region1: #{tpu_custom_call.1} parent=0
    #allocation3 [shape = 'u8[512]{0}', space=vmem, size = 0x400, scoped, tag = 'output window, operand 0, single buffered']
    #allocation4 [shape = 's32[1]{0}', space=sflag, size = 0x4, scoped, tag = 'scoped memory for tpu_custom_call.1']
    %16 = vsyncpa [#allocation4], 0
    // Predicated region
    $region2: #{tpu_custom_call.1} parent=1 // pred_check
      _
    $region3: #{tpu_custom_call.1} parent=1 // pred_check_branch
      %18 = sbr.rel (0) target = $region5
    $region4: #{tpu_custom_call.1} parent=1 // pred_region
      _
    $region5: #{tpu_custom_call.1} parent=1 // pred_fallthru
      _
    // Predicated region
    $region6: #{tpu_custom_call.1} parent=1 // pred_check
      _
    $region7: #{tpu_custom_call.1} parent=1 // pred_check_branch
      %20 = sbr.rel (0) target = $region9
    $region8: #{tpu_custom_call.1} parent=1 // pred_region
      _
    $region9: #{tpu_custom_call.1} parent=1 // pred_fallthru
      _
    // Predicated region
    $region10: #{tpu_custom_call.1} parent=1 // pred_check
      _
    $region11: #{tpu_custom_call.1} parent=1 // pred_check_branch
      %22 = sbr.rel (0) target = $region13
    $region12: #{tpu_custom_call.1} parent=1 // pred_region
      _
    $region13: #{tpu_custom_call.1} parent=1 // pred_fallthru
      _
    // Predicated region
    $region14: #{tpu_custom_call.1} parent=1 // pred_check
      _
    $region15: #{tpu_custom_call.1} parent=1 // pred_check_branch
      %24 = sbr.rel (0) target = $region17
    $region16: #{tpu_custom_call.1} parent=1 // pred_region
      _
    $region17: #{tpu_custom_call.1} parent=1 // pred_fallthru
      _
    // Predicated region
    $region18: #{tpu_custom_call.1} parent=1 // pred_check
      _
    $region19: #{tpu_custom_call.1} parent=1 // pred_check_branch
      %26 = sbr.rel (0) target = $region21
    $region20: #{tpu_custom_call.1} parent=1 // pred_region
      _
    $region21: #{tpu_custom_call.1} parent=1 // pred_fallthru
      _
    // Predicated region
    $region22: #{tpu_custom_call.1} parent=1 // pred_check
      _
    $region23: #{tpu_custom_call.1} parent=1 // pred_check_branch
      %28 = sbr.rel (0) target = $region25
    $region24: #{tpu_custom_call.1} parent=1 // pred_region
      _
    $region25: #{tpu_custom_call.1} parent=1 // pred_fallthru
      _
    // Predicated region
    $region26: #{tpu_custom_call.1} parent=1 // pred_check
      _
    $region27: #{tpu_custom_call.1} parent=1 // pred_check_branch
      %30 = sbr.rel (0) target = $region29
    $region28: #{tpu_custom_call.1} parent=1 // pred_region
      _
    $region29: #{tpu_custom_call.1} parent=1 // pred_fallthru
      _
    // Predicated region
    $region30: #{tpu_custom_call.1} parent=1 // pred_check
      _
    $region31: #{tpu_custom_call.1} parent=1 // pred_check_branch
      %32 = sbr.rel (0) target = $region33
    $region32: #{tpu_custom_call.1} parent=1 // pred_region
      _
    $region33: #{tpu_custom_call.1} parent=1 // pred_fallthru
      _
    // Predicated region
    $region34: #{tpu_custom_call.1} parent=1 // pred_check
      _
    $region35: #{tpu_custom_call.1} parent=1 // pred_check_branch
      %34 = sbr.rel (0) target = $region37
    $region36: #{tpu_custom_call.1} parent=1 // pred_region
      _
    $region37: #{tpu_custom_call.1} parent=1 // pred_fallthru
      _
    %v36 = vld [vmem:[%s0] sm:$0xf]
    %v37 = vld [vmem:[%s0 + $0x4] sm:$0xf]
    %v38 = vld [vmem:[%s0 + $0x8] sm:$0xf]
    %v39 = vld [vmem:[%s0 + $0xc] sm:$0xf]
    %v40 = vld [vmem:[%s0 + $0x10] sm:$0xf]
    %v41 = vld [vmem:[%s0 + $0x14] sm:$0xf]
    %v42 = vld [vmem:[%s0 + $0x18] sm:$0xf]
    %v43 = vld [vmem:[%s0 + $0x1c] sm:$0xf]
    %v44 = vld [vmem:[%s0 + $0x20] sm:$0xf]
    %v45 = vld [vmem:[%s0 + $0x24] sm:$0xf]
    %v46 = vld [vmem:[%s0 + $0x28] sm:$0xf]
    %v47 = vld [vmem:[%s0 + $0x2c] sm:$0xf]
    %v48 = vld [vmem:[%s0 + $0x30] sm:$0xf]
    %v49 = vld [vmem:[%s0 + $0x34] sm:$0xf]
    %v50 = vld [vmem:[%s0 + $0x38] sm:$0xf]
    %v51 = vld [vmem:[%s0 + $0x3c] sm:$0xf]
    %v52 = vld [vmem:[%s1] sm:$0xf]
    %v53 = vld [vmem:[%s1 + $0x4] sm:$0xf]
    %v54 = vld [vmem:[%s1 + $0x8] sm:$0xf]
    %v55 = vld [vmem:[%s1 + $0xc] sm:$0xf]
    %v56 = vld [vmem:[%s1 + $0x10] sm:$0xf]
    %v57 = vld [vmem:[%s1 + $0x14] sm:$0xf]
    %v58 = vld [vmem:[%s1 + $0x18] sm:$0xf]
    %v59 = vld [vmem:[%s1 + $0x1c] sm:$0xf]
    %v60 = vld [vmem:[%s1 + $0x20] sm:$0xf]
    %v61 = vld [vmem:[%s1 + $0x24] sm:$0xf]
    %v62 = vld [vmem:[%s1 + $0x28] sm:$0xf]
    %v63 = vld [vmem:[%s1 + $0x2c] sm:$0xf]
    %v64 = vld [vmem:[%s1 + $0x30] sm:$0xf]
    %v65 = vld [vmem:[%s1 + $0x34] sm:$0xf]
    %v66 = vld [vmem:[%s1 + $0x38] sm:$0xf]
    %v67 = vld [vmem:[%s1 + $0x3c] sm:$0xf]
    %v68 = vld [vmem:[%s2] sm:$0xff]
    %v69 = vld [vmem:[%s2 + $0x8] sm:$0xff]
    %v70 = vld [vmem:[%s2 + $0x10] sm:$0xff]
    %v71 = vld [vmem:[%s2 + $0x18] sm:$0xff]
    %v72 = vld [vmem:[%s2 + $0x20] sm:$0xff]
    %v73 = vld [vmem:[%s2 + $0x28] sm:$0xff]
    %v74 = vld [vmem:[%s2 + $0x30] sm:$0xff]
    %v75 = vld [vmem:[%s2 + $0x38] sm:$0xff]
    %v76 = vld [vmem:[%s2 + $0x40] sm:$0xff]
    %v77 = vld [vmem:[%s2 + $0x48] sm:$0xff]
    %v78 = vld [vmem:[%s2 + $0x50] sm:$0xff]
    %v79 = vld [vmem:[%s2 + $0x58] sm:$0xff]
    %v80 = vld [vmem:[%s2 + $0x60] sm:$0xff]
    %v81 = vld [vmem:[%s2 + $0x68] sm:$0xff]
    %v82 = vld [vmem:[%s2 + $0x70] sm:$0xff]
    %v83 = vld [vmem:[%s2 + $0x78] sm:$0xff]
    %85 = vset.pattern.permute.xlu0 0
    %86 = vperm.xlu0 %85, %v68
    %v87 = vpop.permute.xlu0 %86
    %90 = vset.pattern.permute.xlu0 0
    %91 = vperm.xlu0 %90, %v69
    %v92 = vpop.permute.xlu0 %91
    %95 = vset.pattern.permute.xlu0 0
    %96 = vperm.xlu0 %95, %v70
    %v97 = vpop.permute.xlu0 %96
    %100 = vset.pattern.permute.xlu0 0
    %101 = vperm.xlu0 %100, %v71
    %v102 = vpop.permute.xlu0 %101
    %105 = vset.pattern.permute.xlu0 0
    %106 = vperm.xlu0 %105, %v72
    %v107 = vpop.permute.xlu0 %106
    %110 = vset.pattern.permute.xlu0 0
    %111 = vperm.xlu0 %110, %v73
    %v112 = vpop.permute.xlu0 %111
    %115 = vset.pattern.permute.xlu0 0
    %116 = vperm.xlu0 %115, %v74
    %v117 = vpop.permute.xlu0 %116
    %120 = vset.pattern.permute.xlu0 0
    %121 = vperm.xlu0 %120, %v75
    %v122 = vpop.permute.xlu0 %121
    %125 = vset.pattern.permute.xlu0 0
    %126 = vperm.xlu0 %125, %v76
    %v127 = vpop.permute.xlu0 %126
    %130 = vset.pattern.permute.xlu0 0
    %131 = vperm.xlu0 %130, %v77
    %v132 = vpop.permute.xlu0 %131
    %135 = vset.pattern.permute.xlu0 0
    %136 = vperm.xlu0 %135, %v78
    %v137 = vpop.permute.xlu0 %136
    %140 = vset.pattern.permute.xlu0 0
    %141 = vperm.xlu0 %140, %v79
    %v142 = vpop.permute.xlu0 %141
    %145 = vset.pattern.permute.xlu0 0
    %146 = vperm.xlu0 %145, %v80
    %v147 = vpop.permute.xlu0 %146
    %150 = vset.pattern.permute.xlu0 0
    %151 = vperm.xlu0 %150, %v81
    %v152 = vpop.permute.xlu0 %151
    %155 = vset.pattern.permute.xlu0 0
    %156 = vperm.xlu0 %155, %v82
    %v157 = vpop.permute.xlu0 %156
    %160 = vset.pattern.permute.xlu0 0
    %161 = vperm.xlu0 %160, %v83
    %v162 = vpop.permute.xlu0 %161
    %v180 = vunpack.c.l.b16 %v52
    %v181 = vunpack.c.l.b16 %v53
    %v182 = vunpack.c.l.b16 %v54
    %v183 = vunpack.c.l.b16 %v55
    %v184 = vunpack.c.l.b16 %v56
    %v185 = vunpack.c.l.b16 %v57
    %v186 = vunpack.c.l.b16 %v58
    %v187 = vunpack.c.l.b16 %v59
    %v188 = vunpack.c.l.b16 %v60
    %v189 = vunpack.c.l.b16 %v61
    %v190 = vunpack.c.l.b16 %v62
    %v191 = vunpack.c.l.b16 %v63
    %v192 = vunpack.c.l.b16 %v64
    %v193 = vunpack.c.l.b16 %v65
    %v194 = vunpack.c.l.b16 %v66
    %v195 = vunpack.c.l.b16 %v67
    %v196 = vpack.c.b16 %v181, %v180
    %v197 = vpack.c.b16 %v183, %v182
    %v198 = vpack.c.b16 %v185, %v184
    %v199 = vpack.c.b16 %v187, %v186
    %v200 = vpack.c.b16 %v189, %v188
    %v201 = vpack.c.b16 %v191, %v190
    %v202 = vpack.c.b16 %v193, %v192
    %v203 = vpack.c.b16 %v195, %v194
    %v220 = vunpack.c.l.b16 %v36
    %v221 = vunpack.c.l.b16 %v37
    %v222 = vunpack.c.l.b16 %v38
    %v223 = vunpack.c.l.b16 %v39
    %v224 = vunpack.c.l.b16 %v40
    %v225 = vunpack.c.l.b16 %v41
    %v226 = vunpack.c.l.b16 %v42
    %v227 = vunpack.c.l.b16 %v43
    %v228 = vunpack.c.l.b16 %v44
    %v229 = vunpack.c.l.b16 %v45
    %v230 = vunpack.c.l.b16 %v46
    %v231 = vunpack.c.l.b16 %v47
    %v232 = vunpack.c.l.b16 %v48
    %v233 = vunpack.c.l.b16 %v49
    %v234 = vunpack.c.l.b16 %v50
    %v235 = vunpack.c.l.b16 %v51
    %v236 = vpack.c.b16 %v221, %v220
    %v237 = vpack.c.b16 %v223, %v222
    %v238 = vpack.c.b16 %v225, %v224
    %v239 = vpack.c.b16 %v227, %v226
    %v240 = vpack.c.b16 %v229, %v228
    %v241 = vpack.c.b16 %v231, %v230
    %v242 = vpack.c.b16 %v233, %v232
    %v243 = vpack.c.b16 %v235, %v234
    %vm244 = vcmask 80896
    %v246 = vsel %vm244, %v196, 0
    %v249 = vsel %vm244, %v197, 0
    %v252 = vsel %vm244, %v198, 0
    %v255 = vsel %vm244, %v199, 0
    %v258 = vsel %vm244, %v200, 0
    %v261 = vsel %vm244, %v201, 0
    %v264 = vsel %vm244, %v202, 0
    %v267 = vsel %vm244, %v203, 0
    %v270 = vsel %vm244, %v236, 0
    %v273 = vsel %vm244, %v237, 0
    %v276 = vsel %vm244, %v238, 0
    %v279 = vsel %vm244, %v239, 0
    %v282 = vsel %vm244, %v240, 0
    %v285 = vsel %vm244, %v241, 0
    %v288 = vsel %vm244, %v242, 0
    %v291 = vsel %vm244, %v243, 0
    %293 = vmatprep.subr.bf16.mxu0 0
    %294 = vmatpush1.bf16.xpose.msra.mxu0 %v270
    %295 = vmatprep.subr.bf16.mxu0 0
    %296 = vmatpush1.bf16.xpose.msra.mxu0 %v273
    %297 = vmatprep.subr.bf16.mxu0 0
    %298 = vmatpush1.bf16.xpose.msra.mxu0 %v276
    %299 = vmatprep.subr.bf16.mxu0 0
    %300 = vmatpush1.bf16.xpose.msra.mxu0 %v279
    %301 = vmatprep.subr.bf16.mxu0 0
    %302 = vmatpush1.bf16.xpose.msra.mxu0 %v282
    %303 = vmatprep.subr.bf16.mxu0 0
    %304 = vmatpush1.bf16.xpose.msra.mxu0 %v285
    %305 = vmatprep.subr.bf16.mxu0 0
    %306 = vmatpush1.bf16.xpose.msra.mxu0 %v288
    %307 = vmatprep.subr.bf16.mxu0 0
    %308 = vmatpush1.bf16.xpose.msra.mxu0 %v291
    %309 = vmatprep.subr.bf16.mxu0 0
    %310 = vmatpush1.bf16.xpose.msra.mxu0 0
    %311 = vmatprep.subr.bf16.mxu0 0
    %312 = vmatpush1.bf16.xpose.msra.mxu0 0
    %313 = vmatprep.subr.bf16.mxu0 0
    %314 = vmatpush1.bf16.xpose.msra.mxu0 0
    %315 = vmatprep.subr.bf16.mxu0 0
    %316 = vmatpush1.bf16.xpose.msra.mxu0 0
    %317 = vmatprep.subr.bf16.mxu0 0
    %318 = vmatpush1.bf16.xpose.msra.mxu0 0
    %319 = vmatprep.subr.bf16.mxu0 0
    %320 = vmatpush1.bf16.xpose.msra.mxu0 0
    %321 = vmatprep.subr.bf16.mxu0 0
    %322 = vmatpush1.bf16.xpose.msra.mxu0 0
    %323 = vmatprep.subr.bf16.mxu0 0
    %324 = vmatpush1.bf16.xpose.msra.mxu0 0
    %325 = vmatprep.mubr.bf16.mxu0 0
    %326 = vmatmul.mubr.bf16.gmra.mrb[0].mxu0 %v246
    %v327 = vpop.f32.mrb[0].mxu0
    %v328 = vadd.f32 %v87, %v327
    %v329 = vpop.f32.mrb[0].mxu0
    %v330 = vpop.f32.mrb[0].mxu0
    %v331 = vadd.f32 %v92, %v330
    %v332 = vpop.f32.mrb[0].mxu0
    %333 = vmatprep.mubr.bf16.mxu0 0
    %334 = vmatmul.mubr.bf16.gmra.mrb[0].mxu0 %v249
    %v335 = vpop.f32.mrb[0].mxu0
    %v336 = vadd.f32 %v97, %v335
    %v337 = vpop.f32.mrb[0].mxu0
    %v338 = vpop.f32.mrb[0].mxu0
    %v339 = vadd.f32 %v102, %v338
    %v340 = vpop.f32.mrb[0].mxu0
    %341 = vmatprep.mubr.bf16.mxu0 0
    %342 = vmatmul.mubr.bf16.gmra.mrb[0].mxu0 %v252
    %v343 = vpop.f32.mrb[0].mxu0
    %v344 = vadd.f32 %v107, %v343
    %v345 = vpop.f32.mrb[0].mxu0
    %v346 = vpop.f32.mrb[0].mxu0
    %v347 = vadd.f32 %v112, %v346
    %v348 = vpop.f32.mrb[0].mxu0
    %349 = vmatprep.mubr.bf16.mxu0 0
    %350 = vmatmul.mubr.bf16.gmra.mrb[0].mxu0 %v255
    %v351 = vpop.f32.mrb[0].mxu0
    %v352 = vadd.f32 %v117, %v351
    %v353 = vpop.f32.mrb[0].mxu0
    %v354 = vpop.f32.mrb[0].mxu0
    %v355 = vadd.f32 %v122, %v354
    %v356 = vpop.f32.mrb[0].mxu0
    %357 = vmatprep.mubr.bf16.mxu0 0
    %358 = vmatmul.mubr.bf16.gmra.mrb[0].mxu0 %v258
    %v359 = vpop.f32.mrb[0].mxu0
    %v360 = vadd.f32 %v127, %v359
    %v361 = vpop.f32.mrb[0].mxu0
    %v362 = vpop.f32.mrb[0].mxu0
    %v363 = vadd.f32 %v132, %v362
    %v364 = vpop.f32.mrb[0].mxu0
    %365 = vmatprep.mubr.bf16.mxu0 0
    %366 = vmatmul.mubr.bf16.gmra.mrb[0].mxu0 %v261
    %v367 = vpop.f32.mrb[0].mxu0
    %v368 = vadd.f32 %v137, %v367
    %v369 = vpop.f32.mrb[0].mxu0
    %v370 = vpop.f32.mrb[0].mxu0
    %v371 = vadd.f32 %v142, %v370
    %v372 = vpop.f32.mrb[0].mxu0
    %373 = vmatprep.mubr.bf16.mxu0 0
    %374 = vmatmul.mubr.bf16.gmra.mrb[0].mxu0 %v264
    %v375 = vpop.f32.mrb[0].mxu0
    %v376 = vadd.f32 %v147, %v375
    %v377 = vpop.f32.mrb[0].mxu0
    %v378 = vpop.f32.mrb[0].mxu0
    %v379 = vadd.f32 %v152, %v378
    %v380 = vpop.f32.mrb[0].mxu0
    %381 = vmatprep.mubr.bf16.mxu0 0
    %382 = vmatmul.mubr.bf16.gmra.mrb[0].mxu0 %v267
    %v383 = vpop.f32.mrb[0].mxu0
    %v384 = vadd.f32 %v157, %v383
    %v385 = vpop.f32.mrb[0].mxu0
    %v386 = vpop.f32.mrb[0].mxu0
    %v387 = vadd.f32 %v162, %v386
    %v388 = vpop.f32.mrb[0].mxu0
    %389 = vdwg.mxu0
    %v390 = vmax.f32 %v328, 0.0
    %v391 = vmax.f32 %v331, 0.0
    %v392 = vmax.f32 %v336, 0.0
    %v393 = vmax.f32 %v339, 0.0
    %v394 = vmax.f32 %v344, 0.0
    %v395 = vmax.f32 %v347, 0.0
    %v396 = vmax.f32 %v352, 0.0
    %v397 = vmax.f32 %v355, 0.0
    %v398 = vmax.f32 %v360, 0.0
    %v399 = vmax.f32 %v363, 0.0
    %v400 = vmax.f32 %v368, 0.0
    %v401 = vmax.f32 %v371, 0.0
    %v402 = vmax.f32 %v376, 0.0
    %v403 = vmax.f32 %v379, 0.0
    %v404 = vmax.f32 %v384, 0.0
    %v405 = vmax.f32 %v387, 0.0
    %v406 = vpack.c.bf16 %v391, %v390
    %v407 = vpack.c.bf16 %v393, %v392
    %v408 = vpack.c.bf16 %v395, %v394
    %v409 = vpack.c.bf16 %v397, %v396
    %v410 = vpack.c.bf16 %v399, %v398
    %v411 = vpack.c.bf16 %v401, %v400
    %v412 = vpack.c.bf16 %v403, %v402
    %v413 = vpack.c.bf16 %v405, %v404
    %v414 = vld [vmem:[%s3] sm:$0xf]
    %v415 = vld [vmem:[%s3 + $0x4] sm:$0xf]
    %v416 = vld [vmem:[%s3 + $0x8] sm:$0xf]
    %v417 = vld [vmem:[%s3 + $0xc] sm:$0xf]
    %v418 = vld [vmem:[%s3 + $0x10] sm:$0xf]
    %v419 = vld [vmem:[%s3 + $0x14] sm:$0xf]
    %v420 = vld [vmem:[%s3 + $0x18] sm:$0xf]
    %v421 = vld [vmem:[%s3 + $0x1c] sm:$0xf]
    %v422 = vld [vmem:[%s4] sm:$0xff]
    %v423 = vld [vmem:[%s4 + $0x8] sm:$0xff]
    %v424 = vld [vmem:[%s4 + $0x10] sm:$0xff]
    %v425 = vld [vmem:[%s4 + $0x18] sm:$0xff]
    %v426 = vld [vmem:[%s4 + $0x20] sm:$0xff]
    %v427 = vld [vmem:[%s4 + $0x28] sm:$0xff]
    %v428 = vld [vmem:[%s4 + $0x30] sm:$0xff]
    %v429 = vld [vmem:[%s4 + $0x38] sm:$0xff]
    %431 = vset.pattern.permute.xlu0 0
    %432 = vperm.xlu0 %431, %v422
    %v433 = vpop.permute.xlu0 %432
    %436 = vset.pattern.permute.xlu0 0
    %437 = vperm.xlu0 %436, %v423
    %v438 = vpop.permute.xlu0 %437
    %441 = vset.pattern.permute.xlu0 0
    %442 = vperm.xlu0 %441, %v424
    %v443 = vpop.permute.xlu0 %442
    %446 = vset.pattern.permute.xlu0 0
    %447 = vperm.xlu0 %446, %v425
    %v448 = vpop.permute.xlu0 %447
    %451 = vset.pattern.permute.xlu0 0
    %452 = vperm.xlu0 %451, %v426
    %v453 = vpop.permute.xlu0 %452
    %456 = vset.pattern.permute.xlu0 0
    %457 = vperm.xlu0 %456, %v427
    %v458 = vpop.permute.xlu0 %457
    %461 = vset.pattern.permute.xlu0 0
    %462 = vperm.xlu0 %461, %v428
    %v463 = vpop.permute.xlu0 %462
    %466 = vset.pattern.permute.xlu0 0
    %467 = vperm.xlu0 %466, %v429
    %v468 = vpop.permute.xlu0 %467
    %v478 = vunpack.c.l.b16 %v414
    %v479 = vunpack.c.l.b16 %v415
    %v480 = vunpack.c.l.b16 %v416
    %v481 = vunpack.c.l.b16 %v417
    %v482 = vunpack.c.l.b16 %v418
    %v483 = vunpack.c.l.b16 %v419
    %v484 = vunpack.c.l.b16 %v420
    %v485 = vunpack.c.l.b16 %v421
    %v486 = vpack.c.b16 %v479, %v478
    %v487 = vpack.c.b16 %v481, %v480
    %v488 = vpack.c.b16 %v483, %v482
    %v489 = vpack.c.b16 %v485, %v484
    %494 = vmatprep.subr.bf16.mxu0 0
    %495 = vmatpush1.bf16.msra.mxu0 %v406
    %496 = vmatprep.subr.bf16.mxu0 0
    %497 = vmatpush1.bf16.msra.mxu0 %v407
    %498 = vmatprep.subr.bf16.mxu0 0
    %499 = vmatpush1.bf16.msra.mxu0 %v408
    %500 = vmatprep.subr.bf16.mxu0 0
    %501 = vmatpush1.bf16.msra.mxu0 %v409
    %502 = vmatprep.subr.bf16.mxu0 0
    %503 = vmatpush1.bf16.msra.mxu0 %v410
    %504 = vmatprep.subr.bf16.mxu0 0
    %505 = vmatpush1.bf16.msra.mxu0 %v411
    %506 = vmatprep.subr.bf16.mxu0 0
    %507 = vmatpush1.bf16.msra.mxu0 %v412
    %508 = vmatprep.subr.bf16.mxu0 0
    %509 = vmatpush1.bf16.msra.mxu0 %v413
    %510 = vmatprep.subr.bf16.mxu0 0
    %511 = vmatpush1.bf16.msra.mxu0 0
    %512 = vmatprep.subr.bf16.mxu0 0
    %513 = vmatpush1.bf16.msra.mxu0 0
    %514 = vmatprep.subr.bf16.mxu0 0
    %515 = vmatpush1.bf16.msra.mxu0 0
    %516 = vmatprep.subr.bf16.mxu0 0
    %517 = vmatpush1.bf16.msra.mxu0 0
    %518 = vmatprep.subr.bf16.mxu0 0
    %519 = vmatpush1.bf16.msra.mxu0 0
    %520 = vmatprep.subr.bf16.mxu0 0
    %521 = vmatpush1.bf16.msra.mxu0 0
    %522 = vmatprep.subr.bf16.mxu0 0
    %523 = vmatpush1.bf16.msra.mxu0 0
    %524 = vmatprep.subr.bf16.mxu0 0
    %525 = vmatpush1.bf16.msra.mxu0 0
    %526 = vmatprep.mubr.bf16.mxu0 0
    %527 = vmatmul.mubr.bf16.gmra.mrb[0].mxu0 %v486
    %v528 = vpop.f32.mrb[0].mxu0
    %v529 = vadd.f32 %v433, %v528
    %v530 = vpop.f32.mrb[0].mxu0
    %v531 = vpop.f32.mrb[0].mxu0
    %v532 = vadd.f32 %v438, %v531
    %v533 = vpop.f32.mrb[0].mxu0
    %534 = vmatprep.mubr.bf16.mxu0 0
    %535 = vmatmul.mubr.bf16.gmra.mrb[0].mxu0 %v487
    %v536 = vpop.f32.mrb[0].mxu0
    %v537 = vadd.f32 %v443, %v536
    %v538 = vpop.f32.mrb[0].mxu0
    %v539 = vpop.f32.mrb[0].mxu0
    %v540 = vadd.f32 %v448, %v539
    %v541 = vpop.f32.mrb[0].mxu0
    %542 = vmatprep.mubr.bf16.mxu0 0
    %543 = vmatmul.mubr.bf16.gmra.mrb[0].mxu0 %v488
    %v544 = vpop.f32.mrb[0].mxu0
    %v545 = vadd.f32 %v453, %v544
    %v546 = vpop.f32.mrb[0].mxu0
    %v547 = vpop.f32.mrb[0].mxu0
    %v548 = vadd.f32 %v458, %v547
    %v549 = vpop.f32.mrb[0].mxu0
    %550 = vmatprep.mubr.bf16.mxu0 0
    %551 = vmatmul.mubr.bf16.gmra.mrb[0].mxu0 %v489
    %v552 = vpop.f32.mrb[0].mxu0
    %v553 = vadd.f32 %v463, %v552
    %v554 = vpop.f32.mrb[0].mxu0
    %v555 = vpop.f32.mrb[0].mxu0
    %v556 = vadd.f32 %v468, %v555
    %v557 = vpop.f32.mrb[0].mxu0
    %558 = vdwg.mxu0
    %v559 = vmax.f32 %v529, 0.0
    %v560 = vmax.f32 %v532, 0.0
    %v561 = vmax.f32 %v537, 0.0
    %v562 = vmax.f32 %v540, 0.0
    %v563 = vmax.f32 %v545, 0.0
    %v564 = vmax.f32 %v548, 0.0
    %v565 = vmax.f32 %v553, 0.0
    %v566 = vmax.f32 %v556, 0.0
    %v567 = vpack.c.bf16 %v560, %v559
    %v568 = vpack.c.bf16 %v562, %v561
    %v569 = vpack.c.bf16 %v564, %v563
    %v570 = vpack.c.bf16 %v566, %v565
    %v571 = vld [vmem:[%s5] sm:$0xf]
    %v572 = vld [vmem:[%s5 + $0x4] sm:$0xf]
    %v573 = vld [vmem:[%s5 + $0x8] sm:$0xf]
    %v574 = vld [vmem:[%s5 + $0xc] sm:$0xf]
    %v575 = vld [vmem:[%s5 + $0x10] sm:$0xf]
    %v576 = vld [vmem:[%s5 + $0x14] sm:$0xf]
    %v577 = vld [vmem:[%s5 + $0x18] sm:$0xf]
    %v578 = vld [vmem:[%s5 + $0x1c] sm:$0xf]
    %v579 = vld [vmem:[%s6] sm:$0xff]
    %v580 = vld [vmem:[%s6 + $0x8] sm:$0xff]
    %v581 = vld [vmem:[%s6 + $0x10] sm:$0xff]
    %v582 = vld [vmem:[%s6 + $0x18] sm:$0xff]
    %v583 = vld [vmem:[%s6 + $0x20] sm:$0xff]
    %v584 = vld [vmem:[%s6 + $0x28] sm:$0xff]
    %v585 = vld [vmem:[%s6 + $0x30] sm:$0xff]
    %v586 = vld [vmem:[%s6 + $0x38] sm:$0xff]
    %588 = vset.pattern.permute.xlu0 0
    %589 = vperm.xlu0 %588, %v579
    %v590 = vpop.permute.xlu0 %589
    %593 = vset.pattern.permute.xlu0 0
    %594 = vperm.xlu0 %593, %v580
    %v595 = vpop.permute.xlu0 %594
    %598 = vset.pattern.permute.xlu0 0
    %599 = vperm.xlu0 %598, %v581
    %v600 = vpop.permute.xlu0 %599
    %603 = vset.pattern.permute.xlu0 0
    %604 = vperm.xlu0 %603, %v582
    %v605 = vpop.permute.xlu0 %604
    %608 = vset.pattern.permute.xlu0 0
    %609 = vperm.xlu0 %608, %v583
    %v610 = vpop.permute.xlu0 %609
    %613 = vset.pattern.permute.xlu0 0
    %614 = vperm.xlu0 %613, %v584
    %v615 = vpop.permute.xlu0 %614
    %618 = vset.pattern.permute.xlu0 0
    %619 = vperm.xlu0 %618, %v585
    %v620 = vpop.permute.xlu0 %619
    %623 = vset.pattern.permute.xlu0 0
    %624 = vperm.xlu0 %623, %v586
    %v625 = vpop.permute.xlu0 %624
    %v635 = vunpack.c.l.b16 %v571
    %v636 = vunpack.c.l.b16 %v572
    %v637 = vunpack.c.l.b16 %v573
    %v638 = vunpack.c.l.b16 %v574
    %v639 = vunpack.c.l.b16 %v575
    %v640 = vunpack.c.l.b16 %v576
    %v641 = vunpack.c.l.b16 %v577
    %v642 = vunpack.c.l.b16 %v578
    %v643 = vpack.c.b16 %v636, %v635
    %v644 = vpack.c.b16 %v638, %v637
    %v645 = vpack.c.b16 %v640, %v639
    %v646 = vpack.c.b16 %v642, %v641
    %vm647 = vcmask 523264
    %v649 = vsel %vm647, %v643, 0
    %v652 = vsel %vm647, %v644, 0
    %v655 = vsel %vm647, %v645, 0
    %v658 = vsel %vm647, %v646, 0
    %660 = vmatprep.subr.bf16.mxu0 0
    %661 = vmatpush1.bf16.msra.mxu0 %v567
    %662 = vmatprep.subr.bf16.mxu0 0
    %663 = vmatpush1.bf16.msra.mxu0 %v568
    %664 = vmatprep.subr.bf16.mxu0 0
    %665 = vmatpush1.bf16.msra.mxu0 %v569
    %666 = vmatprep.subr.bf16.mxu0 0
    %667 = vmatpush1.bf16.msra.mxu0 %v570
    %668 = vmatprep.subr.bf16.mxu0 0
    %669 = vmatpush1.bf16.msra.mxu0 0
    %670 = vmatprep.subr.bf16.mxu0 0
    %671 = vmatpush1.bf16.msra.mxu0 0
    %672 = vmatprep.subr.bf16.mxu0 0
    %673 = vmatpush1.bf16.msra.mxu0 0
    %674 = vmatprep.subr.bf16.mxu0 0
    %675 = vmatpush1.bf16.msra.mxu0 0
    %676 = vmatprep.subr.bf16.mxu0 0
    %677 = vmatpush1.bf16.msra.mxu0 0
    %678 = vmatprep.subr.bf16.mxu0 0
    %679 = vmatpush1.bf16.msra.mxu0 0
    %680 = vmatprep.subr.bf16.mxu0 0
    %681 = vmatpush1.bf16.msra.mxu0 0
    %682 = vmatprep.subr.bf16.mxu0 0
    %683 = vmatpush1.bf16.msra.mxu0 0
    %684 = vmatprep.subr.bf16.mxu0 0
    %685 = vmatpush1.bf16.msra.mxu0 0
    %686 = vmatprep.subr.bf16.mxu0 0
    %687 = vmatpush1.bf16.msra.mxu0 0
    %688 = vmatprep.subr.bf16.mxu0 0
    %689 = vmatpush1.bf16.msra.mxu0 0
    %690 = vmatprep.subr.bf16.mxu0 0
    %691 = vmatpush1.bf16.msra.mxu0 0
    %692 = vmatprep.mubr.bf16.mxu0 0
    %693 = vmatmul.mubr.bf16.gmra.mrb[0].mxu0 %v649
    %v694 = vpop.f32.mrb[0].mxu0
    %v695 = vadd.f32 %v590, %v694
    %v696 = vpop.f32.mrb[0].mxu0
    %v697 = vpop.f32.mrb[0].mxu0
    %v698 = vadd.f32 %v595, %v697
    %v699 = vpop.f32.mrb[0].mxu0
    %700 = vmatprep.mubr.bf16.mxu0 0
    %701 = vmatmul.mubr.bf16.gmra.mrb[0].mxu0 %v652
    %v702 = vpop.f32.mrb[0].mxu0
    %v703 = vadd.f32 %v600, %v702
    %v704 = vpop.f32.mrb[0].mxu0
    %v705 = vpop.f32.mrb[0].mxu0
    %v706 = vadd.f32 %v605, %v705
    %v707 = vpop.f32.mrb[0].mxu0
    %708 = vmatprep.mubr.bf16.mxu0 0
    %709 = vmatmul.mubr.bf16.gmra.mrb[0].mxu0 %v655
    %v710 = vpop.f32.mrb[0].mxu0
    %v711 = vadd.f32 %v610, %v710
    %v712 = vpop.f32.mrb[0].mxu0
    %v713 = vpop.f32.mrb[0].mxu0
    %v714 = vadd.f32 %v615, %v713
    %v715 = vpop.f32.mrb[0].mxu0
    %716 = vmatprep.mubr.bf16.mxu0 0
    %717 = vmatmul.mubr.bf16.gmra.mrb[0].mxu0 %v658
    %v718 = vpop.f32.mrb[0].mxu0
    %v719 = vadd.f32 %v620, %v718
    %v720 = vpop.f32.mrb[0].mxu0
    %v721 = vpop.f32.mrb[0].mxu0
    %v722 = vadd.f32 %v625, %v721
    %v723 = vpop.f32.mrb[0].mxu0
    %724 = vdwg.mxu0
    %v725 = vmax.f32 %v695, 0.0
    %v726 = vmax.f32 %v698, 0.0
    %v727 = vmax.f32 %v703, 0.0
    %v728 = vmax.f32 %v706, 0.0
    %v729 = vmax.f32 %v711, 0.0
    %v730 = vmax.f32 %v714, 0.0
    %v731 = vmax.f32 %v719, 0.0
    %v732 = vmax.f32 %v722, 0.0
    %v733 = vpack.c.bf16 %v726, %v725
    %v734 = vpack.c.bf16 %v728, %v727
    %v735 = vpack.c.bf16 %v730, %v729
    %v736 = vpack.c.bf16 %v732, %v731
    %v737 = vld [vmem:[%s7] sm:$0x1]
    %v738 = vld [vmem:[#allocation2] sm:$0x1]
    %740 = vset.pattern.permute.xlu0 0
    %741 = vperm.xlu0 %740, %v738
    %v742 = vpop.permute.xlu0 %741
    %v744 = vlaneseq
    %v745 = vshrl.u32 %v744, 7
    %v746 = vsub.s32 0, %v745
    %v747 = vrot.slane %v742, %v746
    %v749 = vsel %vm647, %v737, 0
    %751 = vmatprep.subr.bf16.mxu0 0
    %752 = vmatpush1.bf16.msra.mxu0 %v733
    %753 = vmatprep.subr.bf16.mxu0 0
    %754 = vmatpush1.bf16.msra.mxu0 %v734
    %755 = vmatprep.subr.bf16.mxu0 0
    %756 = vmatpush1.bf16.msra.mxu0 %v735
    %757 = vmatprep.subr.bf16.mxu0 0
    %758 = vmatpush1.bf16.msra.mxu0 %v736
    %759 = vmatprep.subr.bf16.mxu0 0
    %760 = vmatpush1.bf16.msra.mxu0 0
    %761 = vmatprep.subr.bf16.mxu0 0
    %762 = vmatpush1.bf16.msra.mxu0 0
    %763 = vmatprep.subr.bf16.mxu0 0
    %764 = vmatpush1.bf16.msra.mxu0 0
    %765 = vmatprep.subr.bf16.mxu0 0
    %766 = vmatpush1.bf16.msra.mxu0 0
    %767 = vmatprep.subr.bf16.mxu0 0
    %768 = vmatpush1.bf16.msra.mxu0 0
    %769 = vmatprep.subr.bf16.mxu0 0
    %770 = vmatpush1.bf16.msra.mxu0 0
    %771 = vmatprep.subr.bf16.mxu0 0
    %772 = vmatpush1.bf16.msra.mxu0 0
    %773 = vmatprep.subr.bf16.mxu0 0
    %774 = vmatpush1.bf16.msra.mxu0 0
    %775 = vmatprep.subr.bf16.mxu0 0
    %776 = vmatpush1.bf16.msra.mxu0 0
    %777 = vmatprep.subr.bf16.mxu0 0
    %778 = vmatpush1.bf16.msra.mxu0 0
    %779 = vmatprep.subr.bf16.mxu0 0
    %780 = vmatpush1.bf16.msra.mxu0 0
    %781 = vmatprep.subr.bf16.mxu0 0
    %782 = vmatpush1.bf16.msra.mxu0 0
    %783 = vmatprep.mubr.bf16.mxu0 0
    %784 = vmatmul.mubr.bf16.gmra.mrb[0].mxu0 %v749
    %v785 = vpop.f32.mrb[0].mxu0
    %v786 = vadd.f32 %v747, %v785
    %v787 = vpop.f32.mrb[0].mxu0
    %v788 = vpop.f32.mrb[0].mxu0
    %v789 = vpop.f32.mrb[0].mxu0
    %790 = vdwg.mxu0
    %v791 = vxor.u32 %v786, 2147483648
    %v792 = vmul.f32 %v791, 1.442695
    %v793 = vpow.pop %v792
    %v794 = vadd.f32 %v793, 1.0
    %v795 = vrcp.pop %v794
    %v796 = vmul.f32 1.0, %v795
    %797 = vst [vmem:[#allocation3] sm:$0x1] %v796
    // Predicated region
    $region38: #{tpu_custom_call.1} parent=1 // pred_check
      _
    $region39: #{tpu_custom_call.1} parent=1 // pred_check_branch
      %799 = sbr.rel (0) target = $region41
    $region40: #{tpu_custom_call.1} parent=1 // pred_region
      %s801 = ssub.s32 16, 16
      %802 = vsyncadd [#allocation4], %s801
      %s804 = sshll.u32 [#allocation3], 4
      %s805 = int_to_ptr.vmem [resolvable:$true] %s804
      %807 = dma.vmem_to_hbm [thread:$0]  %s805, 16, %s9, [#allocation4]
    $region41: #{tpu_custom_call.1} parent=1 // pred_fallthru
      _
    // Predicated region
    $region42: #{tpu_custom_call.1} parent=1 // pred_check
      _
    $region43: #{tpu_custom_call.1} parent=1 // pred_check_branch
      %809 = sbr.rel (0) target = $region45
    $region44: #{tpu_custom_call.1} parent=1 // pred_region
      %810 = dma.done [#allocation4], 16
    $region45: #{tpu_custom_call.1} parent=1 // pred_fallthru
      _
    %811 = vsyncpa [#allocation4], 1

</llo_original>
